<compile_context>
chip_gen: v6e
topology: v6e:2x2x1
jax: 0.10.0
libtpu: 0.0.40
codegen_flags: <defaults>
</compile_context>

<pallas_src>
import functools

import jax
import jax.numpy as jnp
from jax.experimental import pallas as pl
from jax.experimental.pallas import tpu as pltpu


# ---------------------------------------------------------------------------
# Pass 1: per-(sample, channel) sum / sum-of-squares reduction over HW tiles.
# ---------------------------------------------------------------------------
def _reduce_kernel(x_ref, sums_ref, acc_ref, *, lane_chunks):
    """x_ref: (1, C, hw_tile); sums_ref: (1, 2, C); acc_ref: (2, C, L) fp32."""
    k = pl.program_id(1)

    @pl.when(k == 0)
    def _init():
        acc_ref[...] = jnp.zeros_like(acc_ref)

    if lane_chunks:
        # Deferred cross-lane reduction: accumulate 128-lane-wide partials with
        # plain VPU adds; only one XLU reduction per sample (at the last tile).
        for j in range(lane_chunks):
            c = x_ref[0, :, pl.ds(j * 128, 128)].astype(jnp.float32)  # (C, 128)
            acc_ref[0] += c
            acc_ref[1] += c * c
    else:
        # HW not a multiple of 128: the whole HW axis is a single (full-extent)
        # block, so a direct per-tile reduction is fine.
        x = x_ref[0].astype(jnp.float32)                              # (C, HW)
        acc_ref[0] += jnp.sum(x, axis=-1, keepdims=True)
        acc_ref[1] += jnp.sum(x * x, axis=-1, keepdims=True)

    @pl.when(k == pl.num_programs(1) - 1)
    def _finalize():
        # (2, C, L) -> (2, C) -> (1, 2, C); channels land on the lane axis.
        sums_ref[...] = jnp.sum(acc_ref[...], axis=-1).reshape(sums_ref.shape)


# ---------------------------------------------------------------------------
# Pass 2: elementwise affine normalization  out = x * a + b   (a, b per channel).
# Also the dedicated inference (training=False) kernel.
# ---------------------------------------------------------------------------
def _affine_kernel(x_ref, a_ref, b_ref, out_ref):
    """x_ref/out_ref: (1, C, hw_tile); a_ref/b_ref: (C, 1) fp32 (resident)."""
    # Mixed-dtype promotion gives fp32 math without materializing an fp32 copy.
    out_ref[...] = (x_ref[...] * a_ref[...] + b_ref[...]).astype(out_ref.dtype)


# ---------------------------------------------------------------------------
# Tiling helper.
# ---------------------------------------------------------------------------
def _choose_hw_tile(hw, c, itemsize):
    """Largest 128-multiple tile that divides HW, capped by a ~1 MiB block budget.

    Returns (hw_tile, lane_chunks); lane_chunks == 0 means 'full-extent fallback'
    (HW not a multiple of 128, forced by the (8,128) block rule).
    """
    if hw % 128 != 0:
        return hw, 0
    max_block_bytes = 1 << 20  # keep 2x-in + 2x-out double buffers tiny vs VMEM
    cap = (max_block_bytes // max(1, c * itemsize)) // 128 * 128
    cap = max(128, min(2048, cap))
    tile = 128
    t = 128
    while t <= min(hw, cap):
        if hw % t == 0:
            tile = t
        t += 128
    return tile, tile // 128


# ---------------------------------------------------------------------------
# Wrapper: full SyncBatchNorm2d forward.
# ---------------------------------------------------------------------------
def sync_batchnorm2d(x, weight, bias, running_mean, running_var,
                     *, eps=1e-5, momentum=0.9, training=True):
    """Forward of SyncBatchNorm2d (single device => all_reduce is identity).

    Returns (out, new_running_mean, new_running_var).
    """
    N, C, H, W = x.shape
    HW = H * W
    x3 = x.reshape(N, C, HW)

    hw_tile, lane_chunks = _choose_hw_tile(HW, C, x.dtype.itemsize)
    num_hw_tiles = HW // hw_tile
    acc_lanes = 128 if lane_chunks else 1

    w32 = weight.astype(jnp.float32)
    b32 = bias.astype(jnp.float32)

    if training:
        sums = pl.pallas_call(
            functools.partial(_reduce_kernel, lane_chunks=lane_chunks),
            out_shape=jax.ShapeDtypeStruct((N, 2, C), jnp.float32),
            grid=(N, num_hw_tiles),
            in_specs=[pl.BlockSpec((1, C, hw_tile), lambda n, k: (n, 0, k))],
            out_specs=pl.BlockSpec((1, 2, C), lambda n, k: (n, 0, 0)),
            scratch_shapes=[pltpu.VMEM((2, C, acc_lanes), jnp.float32)],
            compiler_params=pltpu.CompilerParams(
                dimension_semantics=("parallel", "arbitrary")),
        )(x3)

        inv_hw = 1.0 / HW
        alpha = float(HW) / float(HW - 1 + eps)
        mean_in = sums[:, 0, :] * inv_hw                       # (N, C)
        ex2 = sums[:, 1, :] * inv_hw                           # (N, C)
        # temp = var_in * alpha + mean_in^2 = alpha*E[x^2] + (1-alpha)*mean_in^2
        temp = alpha * ex2 + (1.0 - alpha) * mean_in * mean_in
        mean_bn = jnp.mean(mean_in, axis=0)                    # (C,)
        var_bn = jnp.mean(temp, axis=0) - mean_bn * mean_bn    # (C,)
        # TODO(synk): dist.all_reduce of (mean_bn, mean_bn**2 + var_bn) across
        # devices omitted; single-device world_size == 1 makes it the identity.
        var_bn = jnp.maximum(var_bn, 0.0)  # guard fp cancellation of E[x^2]-E[x]^2

        new_running_mean = running_mean * momentum + (1.0 - momentum) * mean_bn
        new_running_var = running_var * momentum + (1.0 - momentum) * var_bn
    else:
        mean_bn = running_mean.astype(jnp.float32)
        var_bn = running_var.astype(jnp.float32)
        new_running_mean = running_mean
        new_running_var = running_var

    # Fold per-channel constants once (outside the tile loop).
    inv_std = jax.lax.rsqrt(var_bn + eps)                      # (C,)
    a = (w32 * inv_std).reshape(C, 1)
    b = (b32 - mean_bn * w32 * inv_std).reshape(C, 1)

    out3 = pl.pallas_call(
        _affine_kernel,
        out_shape=jax.ShapeDtypeStruct((N, C, HW), x.dtype),
        grid=(N, num_hw_tiles),
        in_specs=[
            pl.BlockSpec((1, C, hw_tile), lambda n, k: (n, 0, k)),
            pl.BlockSpec((C, 1), lambda n, k: (0, 0)),
            pl.BlockSpec((C, 1), lambda n, k: (0, 0)),
        ],
        out_specs=pl.BlockSpec((1, C, hw_tile), lambda n, k: (n, 0, k)),
        compiler_params=pltpu.CompilerParams(
            dimension_semantics=("parallel", "parallel")),
    )(x3, a, b)

    return out3.reshape(N, C, H, W), new_running_mean, new_running_var


# ---------------------------------------------------------------------------
# Pure-JAX reference mirroring SyncBNFunc.forward (training, world_size == 1).
# ---------------------------------------------------------------------------
def _reference_forward(x, weight, bias, eps):
    N, C, H, W = x.shape
    xd = x.reshape(N, C, -1).astype(jnp.float32)
    mean_in = xd.mean(-1, keepdims=True)
    var_in = ((xd - mean_in) ** 2).mean(-1, keepdims=True)
    hw = H * W
    alpha = hw / (hw - 1 + eps)
    var_in = var_in * alpha
    temp = var_in + mean_in ** 2
    mean_bn = mean_in.mean(0, keepdims=True)
    var_bn = temp.mean(0, keepdims=True) - mean_bn ** 2
    x_hat = (xd - mean_bn) / jnp.sqrt(var_bn + eps)
    x_hat = x_hat.reshape(N, C, H, W)
    return x_hat * weight.reshape(1, C, 1, 1) + bias.reshape(1, C, 1, 1)


if __name__ == "__main__":
    N, C, H, W = 2, 4, 16, 16
    eps = 1e-5
    momentum = 0.9

    key = jax.random.PRNGKey(0)
    x = jax.random.normal(key, (N, C, H, W), dtype=jnp.float32)

    # Matches SyncBatchNorm2d.reset_parameters (last_gamma=False):
    # weight=1, bias=0, running_mean=0, running_var=0.
    weight = jnp.ones((C,), dtype=jnp.float32)
    bias = jnp.zeros((C,), dtype=jnp.float32)
    running_mean = jnp.zeros((C,), dtype=jnp.float32)
    running_var = jnp.zeros((C,), dtype=jnp.float32)

    out, new_rm, new_rv = sync_batchnorm2d(
        x, weight, bias, running_mean, running_var,
        eps=eps, momentum=momentum, training=True)
    out = jax.block_until_ready(out)
    jax.block_until_ready((new_rm, new_rv))

    ref = _reference_forward(x, weight, bias, eps)
    assert out.shape == (N, C, H, W) and out.dtype == x.dtype
    assert jnp.allclose(out, ref, rtol=1e-4, atol=1e-4), "mismatch vs reference"

    print("KERNEL_OK")
</pallas_src>

<mosaic_0001>
module attributes {stable_mosaic.version = 11 : i64} {
  func.func @_reduce_kernel(%arg0: i32, %arg1: i32, %arg2: memref<1x4x256xf32, #tpu.memory_space<vmem>>, %arg3: memref<1x2x4xf32, #tpu.memory_space<vmem>>, %arg4: memref<2x4x128xf32, #tpu.memory_space<vmem>>) attributes {dimension_semantics = [#tpu.dimension_semantics<parallel>, #tpu.dimension_semantics<arbitrary>], iteration_bounds = array<i64: 2, 1>, scalar_prefetch = 0 : i64, scratch_operands = 1 : i64, tpu.core_type = #tpu.core_type<tc>, window_params = [{transform_indices = @transform_0, window_bounds = array<i64: 1, 4, 256>}, {transform_indices = @transform_1, window_bounds = array<i64: 1, 2, 4>}]} {
    %c0_i32 = arith.constant 0 : i32
    %0 = arith.cmpi eq, %arg1, %c0_i32 : i32
    %1 = arith.extui %0 : i1 to i32
    %c0_i32_0 = arith.constant 0 : i32
    %2 = arith.cmpi ne, %1, %c0_i32_0 : i32
    scf.if %2 {
      %cst = arith.constant 0.000000e+00 : f32
      %36 = vector.broadcast %cst : f32 to vector<2x4x128xf32>
      %c0_30 = arith.constant 0 : index
      %c0_31 = arith.constant 0 : index
      %c0_32 = arith.constant 0 : index
      %37 = vector.load %arg4[%c0_30, %c0_31, %c0_32] : memref<2x4x128xf32, #tpu.memory_space<vmem>>, vector<2x4x128xf32>
      tpu.vector_store %arg4[%c0_30, %c0_31, %c0_32], %36 {strides = array<i32>} : memref<2x4x128xf32, #tpu.memory_space<vmem>>, vector<2x4x128xf32>,
    } else {
    }
    %c0 = arith.constant 0 : index
    %c0_1 = arith.constant 0 : index
    %c0_2 = arith.constant 0 : index
    %3 = vector.load %arg2[%c0, %c0_1, %c0_2] : memref<1x4x256xf32, #tpu.memory_space<vmem>>, vector<1x4x128xf32>
    %4 = vector.shape_cast %3 : vector<1x4x128xf32> to vector<4x128xf32>
    %c0_3 = arith.constant 0 : index
    %c0_4 = arith.constant 0 : index
    %c0_5 = arith.constant 0 : index
    %5 = vector.load %arg4[%c0_3, %c0_4, %c0_5] : memref<2x4x128xf32, #tpu.memory_space<vmem>>, vector<1x4x128xf32>
    %6 = vector.shape_cast %5 : vector<1x4x128xf32> to vector<4x128xf32>
    %7 = arith.addf %6, %4 : vector<4x128xf32>
    %c0_6 = arith.constant 0 : index
    %c0_7 = arith.constant 0 : index
    %c0_8 = arith.constant 0 : index
    %8 = vector.load %arg4[%c0_6, %c0_7, %c0_8] : memref<2x4x128xf32, #tpu.memory_space<vmem>>, vector<1x4x128xf32>
    %9 = vector.shape_cast %8 : vector<1x4x128xf32> to vector<4x128xf32>
    %10 = vector.shape_cast %7 : vector<4x128xf32> to vector<1x4x128xf32>
    tpu.vector_store %arg4[%c0_6, %c0_7, %c0_8], %10 {strides = array<i32>} : memref<2x4x128xf32, #tpu.memory_space<vmem>>, vector<1x4x128xf32>,
    %c1 = arith.constant 1 : index
    %c0_9 = arith.constant 0 : index
    %c0_10 = arith.constant 0 : index
    %11 = vector.load %arg4[%c1, %c0_9, %c0_10] : memref<2x4x128xf32, #tpu.memory_space<vmem>>, vector<1x4x128xf32>
    %12 = vector.shape_cast %11 : vector<1x4x128xf32> to vector<4x128xf32>
    %13 = arith.mulf %4, %4 : vector<4x128xf32>
    %14 = arith.addf %12, %13 : vector<4x128xf32>
    %c1_11 = arith.constant 1 : index
    %c0_12 = arith.constant 0 : index
    %c0_13 = arith.constant 0 : index
    %15 = vector.load %arg4[%c1_11, %c0_12, %c0_13] : memref<2x4x128xf32, #tpu.memory_space<vmem>>, vector<1x4x128xf32>
    %16 = vector.shape_cast %15 : vector<1x4x128xf32> to vector<4x128xf32>
    %17 = vector.shape_cast %14 : vector<4x128xf32> to vector<1x4x128xf32>
    tpu.vector_store %arg4[%c1_11, %c0_12, %c0_13], %17 {strides = array<i32>} : memref<2x4x128xf32, #tpu.memory_space<vmem>>, vector<1x4x128xf32>,
    %c0_14 = arith.constant 0 : index
    %c0_15 = arith.constant 0 : index
    %c128 = arith.constant 128 : index
    %18 = vector.load %arg2[%c0_14, %c0_15, %c128] : memref<1x4x256xf32, #tpu.memory_space<vmem>>, vector<1x4x128xf32>
    %19 = vector.shape_cast %18 : vector<1x4x128xf32> to vector<4x128xf32>
    %c0_16 = arith.constant 0 : index
    %c0_17 = arith.constant 0 : index
    %c0_18 = arith.constant 0 : index
    %20 = vector.load %arg4[%c0_16, %c0_17, %c0_18] : memref<2x4x128xf32, #tpu.memory_space<vmem>>, vector<1x4x128xf32>
    %21 = vector.shape_cast %20 : vector<1x4x128xf32> to vector<4x128xf32>
    %22 = arith.addf %21, %19 : vector<4x128xf32>
    %c0_19 = arith.constant 0 : index
    %c0_20 = arith.constant 0 : index
    %c0_21 = arith.constant 0 : index
    %23 = vector.load %arg4[%c0_19, %c0_20, %c0_21] : memref<2x4x128xf32, #tpu.memory_space<vmem>>, vector<1x4x128xf32>
    %24 = vector.shape_cast %23 : vector<1x4x128xf32> to vector<4x128xf32>
    %25 = vector.shape_cast %22 : vector<4x128xf32> to vector<1x4x128xf32>
    tpu.vector_store %arg4[%c0_19, %c0_20, %c0_21], %25 {strides = array<i32>} : memref<2x4x128xf32, #tpu.memory_space<vmem>>, vector<1x4x128xf32>,
    %c1_22 = arith.constant 1 : index
    %c0_23 = arith.constant 0 : index
    %c0_24 = arith.constant 0 : index
    %26 = vector.load %arg4[%c1_22, %c0_23, %c0_24] : memref<2x4x128xf32, #tpu.memory_space<vmem>>, vector<1x4x128xf32>
    %27 = vector.shape_cast %26 : vector<1x4x128xf32> to vector<4x128xf32>
    %28 = arith.mulf %19, %19 : vector<4x128xf32>
    %29 = arith.addf %27, %28 : vector<4x128xf32>
    %c1_25 = arith.constant 1 : index
    %c0_26 = arith.constant 0 : index
    %c0_27 = arith.constant 0 : index
    %30 = vector.load %arg4[%c1_25, %c0_26, %c0_27] : memref<2x4x128xf32, #tpu.memory_space<vmem>>, vector<1x4x128xf32>
    %31 = vector.shape_cast %30 : vector<1x4x128xf32> to vector<4x128xf32>
    %32 = vector.shape_cast %29 : vector<4x128xf32> to vector<1x4x128xf32>
    tpu.vector_store %arg4[%c1_25, %c0_26, %c0_27], %32 {strides = array<i32>} : memref<2x4x128xf32, #tpu.memory_space<vmem>>, vector<1x4x128xf32>,
    %c0_i32_28 = arith.constant 0 : i32
    %33 = arith.cmpi eq, %arg1, %c0_i32_28 : i32
    %34 = arith.extui %33 : i1 to i32
    %c0_i32_29 = arith.constant 0 : i32
    %35 = arith.cmpi ne, %34, %c0_i32_29 : i32
    scf.if %35 {
      %c0_30 = arith.constant 0 : index
      %c0_31 = arith.constant 0 : index
      %c0_32 = arith.constant 0 : index
      %36 = vector.load %arg4[%c0_30, %c0_31, %c0_32] : memref<2x4x128xf32, #tpu.memory_space<vmem>>, vector<2x4x128xf32>
      %cst = arith.constant dense<0.000000e+00> : vector<2x4xf32>
      %37 = vector.multi_reduction <add>, %36, %cst [2] : vector<2x4x128xf32> to vector<2x4xf32>
      %38 = vector.shape_cast %37 : vector<2x4xf32> to vector<1x2x4xf32>
      %c0_33 = arith.constant 0 : index
      %c0_34 = arith.constant 0 : index
      %c0_35 = arith.constant 0 : index
      %39 = vector.load %arg3[%c0_33, %c0_34, %c0_35] : memref<1x2x4xf32, #tpu.memory_space<vmem>>, vector<1x2x4xf32>
      tpu.vector_store %arg3[%c0_33, %c0_34, %c0_35], %38 {strides = array<i32>} : memref<1x2x4xf32, #tpu.memory_space<vmem>>, vector<1x2x4xf32>,
    } else {
    }
    return
  }
  func.func @transform_0(%arg0: i32, %arg1: i32) -> (i32, i32, i32) {
    %c0_i32 = arith.constant 0 : i32
    %c0_i32_0 = arith.constant 0 : i32
    return %arg0, %c0_i32, %arg1 : i32, i32, i32
  }
  func.func @transform_1(%arg0: i32, %arg1: i32) -> (i32, i32, i32) {
    %c0_i32 = arith.constant 0 : i32
    %c0_i32_0 = arith.constant 0 : i32
    %c0_i32_1 = arith.constant 0 : i32
    return %arg0, %c0_i32, %c0_i32_0 : i32, i32, i32
  }
}

</mosaic_0001>

<llo_original>
// kernel: tpu_custom_call.1
$region0: #{tpu_custom_call.1}
  #allocation0 [shape = 'u32[]', space=smem, size = 0x4, offset = 0x4, fixed_abs, tag = 'smem constant byte address 0x4 - core index']
  #allocation1 [shape = 'u32[144,128]{1,0:T(1,128)}', space=vmem, size = 0x12000, scoped, tag = 'internal scratch']
  #allocation2 [shape = 'f32[2,4,128]{2,1,0:T(4,128)}', space=vmem, size = 0x1000, scoped, tag = 'scratch operand']
  %s0 = inlined_call_operand.hbm [shape: f32[2,4,256], index: 0, kind: input, shape index: {}]
  %s1 = inlined_call_operand.hbm [shape: f32[2,2,4], index: 1, kind: output, shape index: {}]
  %s2 = sld [smem:[#allocation0]]
  $region49: #{tpu_custom_call.1} parent=0
    _
  %s4 = ssub.s32 1, %s2
  %s5 = scalar_select 0, %s4, %s2
  $region1: #{tpu_custom_call.1} parent=0
    #allocation3 [shape = 'u8[8192]{0}', space=vmem, size = 0x2000, scoped, tag = 'input window, operand 0']
    #allocation4 [shape = 's32[2]{0}', space=sflag, size = 0x8, scoped, tag = 'scoped memory for tpu_custom_call.1']
    #allocation5 [shape = 's32[2]{0}', space=sflag, size = 0x8, scoped, tag = 'scoped memory for tpu_custom_call.1']
    #allocation6 [shape = 'u8[2048]{0}', space=vmem, size = 0x800, scoped, tag = 'output window, operand 0']
    %6 = vsyncpa [#allocation4], 0
    %s7 = scalar_lea.sflag [#allocation4], 1
    %8 = vsyncpa %s7, 0
    %9 = vsyncpa [#allocation5], 0
    %s10 = scalar_lea.sflag [#allocation5], 1
    %11 = vsyncpa %s10, 0
    loop: start=0, step=1, limit=4
    $region2: #{tpu_custom_call.1} parent=1 // loop_pre_header
      _
    $region3: #{tpu_custom_call.1} parent=1 // loop_header
      %s13 = sphi 0, %s17
      %p14 = scmp.ge.s32.totalorder %s13, 4
      %s20 = sphi 0, %s32
      %s21 = sphi 0, %s28
      %s22 = sphi 0, %s20
      %s23 = sphi 0, %s21
      %s24 = sphi 0, %s22
      %s25 = sphi 0, %s23
      %s37 = sphi 0, %s39
      %s40 = sphi 0, %s37
      %s41 = sphi 0, %s40
      %s57 = sphi 0, %s41
      %s63 = sphi 0, %s65
      %s66 = sphi 0, %s63
      %s67 = sphi 0, %s66
      %s83 = sphi 0, %s67
    $region4: #{tpu_custom_call.1} parent=1 // loop_header_branch
      %16 = sbr.rel (%p14) target = $region8
    $region5: #{tpu_custom_call.1} parent=1 // loop_body
      %s18 = ssub.s32 %s13, 1
      %s19 = ssub.s32 %s13, 2
      %s26 = sadd.s32 1, %s21
      %p27 = scmp.ge.s32.totalorder %s26, 1
      %s28 = scalar_select %p27, 0, %s26
      %s29 = sadd.s32 1, %s20
      %s30 = scalar_select %p27, %s29, %s20
      %p31 = scmp.ge.s32.totalorder %s30, 2
      %s32 = scalar_select %p31, 0, %s30
      %s33 = ssub.s32 %s20, %s32
      %s34 = ssub.s32 %s21, %s28
      %s35 = sor.u32 %s33, %s34
      %p36 = scmp.eq.s32.totalorder %s35, 0
      %s38 = sadd.s32 %s37, 1
      %s39 = scalar_select %p36, %s37, %s38
      %p42 = pneg %p36
      %p43 = scmp.eq.s32.totalorder %s13, 1
      %p44 = por %p42, %p43
      %p45 = scmp.ne.s32.totalorder %s37, %s40
      %p46 = scmp.eq.s32.totalorder %s13, 0
      %p47 = por %p45, %p46
      %p48 = scmp.ne.s32.totalorder %s37, %s40
      %p49 = scmp.eq.s32.totalorder %s18, 1
      %p50 = por %p48, %p49
      %p51 = scmp.ne.s32.totalorder %s40, %s41
      %p52 = scmp.eq.s32.totalorder %s18, 0
      %p53 = por %p51, %p52
      %p54 = scmp.ne.s32.totalorder %s40, %s41
      %p55 = scmp.eq.s32.totalorder %s19, 1
      %p56 = por %p54, %p55
      %p58 = scmp.ne.s32.totalorder %s41, %s57
      %p59 = scmp.eq.s32.totalorder %s19, 0
      %p60 = por %p58, %p59
      %s61 = ssub.s32 %s20, %s32
      %p62 = scmp.eq.s32.totalorder %s61, 0
      %s64 = sadd.s32 %s63, 1
      %s65 = scalar_select %p62, %s63, %s64
      %p68 = pneg %p62
      %p69 = scmp.eq.s32.totalorder %s13, 1
      %p70 = por %p68, %p69
      %p71 = scmp.ne.s32.totalorder %s63, %s66
      %p72 = scmp.eq.s32.totalorder %s13, 0
      %p73 = por %p71, %p72
      %p74 = scmp.ne.s32.totalorder %s63, %s66
      %p75 = scmp.eq.s32.totalorder %s18, 1
      %p76 = por %p74, %p75
      %p77 = scmp.ne.s32.totalorder %s66, %s67
      %p78 = scmp.eq.s32.totalorder %s18, 0
      %p79 = por %p77, %p78
      %p80 = scmp.ne.s32.totalorder %s66, %s67
      %p81 = scmp.eq.s32.totalorder %s19, 1
      %p82 = por %p80, %p81
      %p84 = scmp.ne.s32.totalorder %s67, %s83
      %p85 = scmp.eq.s32.totalorder %s19, 0
      %p86 = por %p84, %p85
      %p87 = scmp.le.s32.totalorder 1, %s13
      %p88 = scmp.lt.s32.totalorder %s13, 3
      %p89 = pnand %p87, %p88
      %p90 = pneg %p89
      // Predicated region
      $region9: #{tpu_custom_call.1} parent=5 // pred_check
        _
      $region10: #{tpu_custom_call.1} parent=5 // pred_check_branch
        %92 = sbr.rel (%p89) target = $region12
      $region11: #{tpu_custom_call.1} parent=5 // pred_region
        %s93 = ssub.s32 %s13, 1
      $region12: #{tpu_custom_call.1} parent=5 // pred_fallthru
        _
      %p94 = scmp.lt.s32.totalorder %s13, 2
      // Predicated region
      $region13: #{tpu_custom_call.1} parent=5 // pred_check
        %p95 = pneg %p94
      $region14: #{tpu_custom_call.1} parent=5 // pred_check_branch
        %97 = sbr.rel (%p95) target = $region16
      $region15: #{tpu_custom_call.1} parent=5 // pred_region
        // Predicated region
        $region17: #{tpu_custom_call.1} parent=15 // pred_check
          %p98 = pneg %p47
        $region18: #{tpu_custom_call.1} parent=15 // pred_check_branch
          %100 = sbr.rel (%p98) target = $region20
        $region19: #{tpu_custom_call.1} parent=15 // pred_region
          %s101 = sand.u32 %s37, 1
          %s102 = scalar_lea.sflag [#allocation4], %s101
          %s103 = sand.u32 %s37, 1
          %s104 = smul.addr %s103, 8
          %s105 = scalar_lea.vmem [#allocation3], %s104
          %s106 = smul.u32 2, %s21
          %s108 = ssub.s32 128, 128
          %109 = vsyncadd %s102, %s108
          %s110 = smul.addr %s20, 2
          %s111 = sadd.s32 %s106, %s110
          %s112 = smul.addr %s111, 64
          %s113 = scalar_lea.hbm %s0, %s112
          %s115 = sshll.u32 %s105, 4
          %s116 = int_to_ptr.vmem [resolvable:$true] %s115
          %118 = dma.hbm_to_vmem [thread:$0]  %s113, 128, %s116, %s102
        $region20: #{tpu_custom_call.1} parent=15 // pred_fallthru
          _
      $region16: #{tpu_custom_call.1} parent=5 // pred_fallthru
        _
      %p119 = scmp.le.s32.totalorder 1, %s13
      %p120 = scmp.lt.s32.totalorder %s13, 3
      %p121 = pnand %p119, %p120
      %p122 = pneg %p121
      // Predicated region
      $region21: #{tpu_custom_call.1} parent=5 // pred_check
        _
      $region22: #{tpu_custom_call.1} parent=5 // pred_check_branch
        %124 = sbr.rel (%p121) target = $region24
      $region23: #{tpu_custom_call.1} parent=5 // pred_region
        %s125 = ssub.s32 %s13, 1
        %s126 = sand.u32 %s40, 1
        %s127 = scalar_lea.sflag [#allocation4], %s126
        %s128 = sand.u32 %s40, 1
        %s129 = smul.addr %s128, 8
        %s130 = scalar_lea.vmem [#allocation3], %s129
        // Predicated region
        $region25: #{tpu_custom_call.1} parent=23 // pred_check
          %p131 = pneg %p53
        $region26: #{tpu_custom_call.1} parent=23 // pred_check_branch
          %133 = sbr.rel (%p131) target = $region28
        $region27: #{tpu_custom_call.1} parent=23 // pred_region
          %134 = dma.done %s127, 128
        $region28: #{tpu_custom_call.1} parent=23 // pred_fallthru
          _
        %s135 = sand.u32 %s40, 1
        %s136 = scalar_lea.sflag [#allocation4], %s135
        %s137 = sand.u32 %s40, 1
        %s138 = smul.addr %s137, 8
        %s139 = scalar_lea.vmem [#allocation3], %s138
        %p140 = pneg %p53
        %p141 = pneg %p50
        %p142 = pneg %p79
        %p143 = pneg %p76
        %s144 = sand.u32 %s66, 1
        %s145 = scalar_lea.sflag [#allocation5], %s144
        %s146 = sand.u32 %s66, 1
        %s147 = smul.addr %s146, 2
        %s148 = scalar_lea.vmem [#allocation6], %s147
        %s149 = smul.u32 2, %s23
        %p150 = scmp.eq.s32.totalorder %s23, 0
        // Predicated region
        $region29: #{tpu_custom_call.1} parent=23 // pred_check
          %p151 = pneg %p150
        $region30: #{tpu_custom_call.1} parent=23 // pred_check_branch
          %153 = sbr.rel (%p151) target = $region32
        $region31: #{tpu_custom_call.1} parent=23 // pred_region
          %154 = vst [vmem:[#allocation2] sm:$0xf] 0.0
          %155 = vst [vmem:[#allocation2 + $0x4] sm:$0xf] 0.0
        $region32: #{tpu_custom_call.1} parent=23 // pred_fallthru
          _
        %v156 = vld [vmem:[%s130] sm:$0xf]
        %v157 = vld [vmem:[#allocation2] sm:$0xf]
        %v158 = vadd.f32 %v157, %v156
        %159 = vst [vmem:[#allocation2] sm:$0xf] %v158
        %s160 = scalar_lea.vmem [#allocation2], 4
        %v161 = vld [vmem:[%s160] sm:$0xf]
        %v162 = vmul.f32 %v156, %v156
        %v163 = vadd.f32 %v161, %v162
        %164 = vst [vmem:[%s160] sm:$0xf] %v163
        %v165 = vld [vmem:[%s130 + $0x4] sm:$0xf]
        %v166 = vld [vmem:[#allocation2] sm:$0xf]
        %v167 = vadd.f32 %v166, %v165
        %168 = vst [vmem:[#allocation2] sm:$0xf] %v167
        %v169 = vld [vmem:[%s160] sm:$0xf]
        %v170 = vmul.f32 %v165, %v165
        %v171 = vadd.f32 %v169, %v170
        %172 = vst [vmem:[%s160] sm:$0xf] %v171
        // Predicated region
        $region33: #{tpu_custom_call.1} parent=23 // pred_check
          %p173 = pneg %p150
        $region34: #{tpu_custom_call.1} parent=23 // pred_check_branch
          %175 = sbr.rel (%p173) target = $region36
        $region35: #{tpu_custom_call.1} parent=23 // pred_region
          %v176 = vld [vmem:[#allocation2] sm:$0xf]
          %v177 = vld [vmem:[#allocation2 + $0x4] sm:$0xf]
          %vm178 = vcmask 1043456
          %v179 = vsel %vm178, %v176, 0.0
          %180 = vadd.xlane.f32.xlu0 %v179
          %v181 = vpop.xlane.xlu0 %180
          %v182 = vsel %vm178, %v177, 0.0
          %183 = vadd.xlane.f32.xlu0 %v182
          %v184 = vpop.xlane.xlu0 %183
          %v187 = vlaneseq
          %v188 = vand.u32 %v187, 127
          %v189 = vlaneseq
          %v190 = vshrl.u32 %v189, 7
          %v191 = vsub.s32 %v188, %v190
          %v192 = vrot.slane %v181, %v191
          %v193 = vlaneseq
          %v194 = vshrl.u32 %v193, 7
          %v195 = vsub.s32 %v188, %v194
          %v196 = vrot.slane %v184, %v195
          %vm197 = vcmask 1041409
          %v198 = vsel %vm197, %v196, %v192
          %vm200 = vcmask 25600
          %201 = vst.msk [vmem:[%s148] sm:$0x3] %vm200, %v198
        $region36: #{tpu_custom_call.1} parent=23 // pred_fallthru
          _
        %s202 = sand.u32 %s66, 1
        %s203 = scalar_lea.sflag [#allocation5], %s202
        %s204 = sand.u32 %s66, 1
        %s205 = smul.addr %s204, 2
        %s206 = scalar_lea.vmem [#allocation6], %s205
        // Predicated region
        $region37: #{tpu_custom_call.1} parent=23 // pred_check
          %p207 = pneg %p76
        $region38: #{tpu_custom_call.1} parent=23 // pred_check_branch
          %209 = sbr.rel (%p207) target = $region40
        $region39: #{tpu_custom_call.1} parent=23 // pred_region
          %s211 = ssub.s32 32, 32
          %212 = vsyncadd %s203, %s211
          %s213 = smul.addr %s22, 32
          %s214 = scalar_lea.hbm %s1, %s213
          %s216 = sshll.u32 %s206, 4
          %s217 = int_to_ptr.vmem [resolvable:$true] %s216
          %219 = dma.vmem_to_hbm [thread:$0]  %s217, 32, %s214, %s203
        $region40: #{tpu_custom_call.1} parent=23 // pred_fallthru
          _
      $region24: #{tpu_custom_call.1} parent=5 // pred_fallthru
        _
      %p220 = scmp.le.s32.totalorder 2, %s13
      // Predicated region
      $region41: #{tpu_custom_call.1} parent=5 // pred_check
        %p221 = pneg %p220
      $region42: #{tpu_custom_call.1} parent=5 // pred_check_branch
        %223 = sbr.rel (%p221) target = $region44
      $region43: #{tpu_custom_call.1} parent=5 // pred_region
        %s224 = ssub.s32 %s13, 2
        // Predicated region
        $region45: #{tpu_custom_call.1} parent=43 // pred_check
          %p225 = pneg %p82
        $region46: #{tpu_custom_call.1} parent=43 // pred_check_branch
          %227 = sbr.rel (%p225) target = $region48
        $region47: #{tpu_custom_call.1} parent=43 // pred_region
          %s228 = sand.u32 %s67, 1
          %s229 = scalar_lea.sflag [#allocation5], %s228
          %s230 = sand.u32 %s67, 1
          %s231 = smul.addr %s230, 2
          %s232 = scalar_lea.vmem [#allocation6], %s231
          %233 = dma.done %s229, 32
        $region48: #{tpu_custom_call.1} parent=43 // pred_fallthru
          _
      $region44: #{tpu_custom_call.1} parent=5 // pred_fallthru
        _
    $region6: #{tpu_custom_call.1} parent=1 // loop_footer
      %s17 = sadd.s32 1, %s13
    $region7: #{tpu_custom_call.1} parent=1 // loop_footer_branch
      %12 = sbr.rel target = $region3
    $region8: #{tpu_custom_call.1} parent=1 // loop_exit
      _
    %234 = vsyncpa [#allocation4], 1
    %s235 = scalar_lea.sflag [#allocation4], 1
    %236 = vsyncpa %s235, 1
    %237 = vsyncpa [#allocation5], 1
    %s238 = scalar_lea.sflag [#allocation5], 1
    %239 = vsyncpa %s238, 1

</llo_original>
